<compile_context>
chip_gen: v5e
topology: v5e:2x2
jax: 0.10.0
libtpu: 0.0.40
codegen_flags: <defaults>
</compile_context>

<pallas_src>
import math

import jax
import jax.numpy as jnp
from jax.experimental import pallas as pl
from jax.experimental.pallas import tpu as pltpu


def _round_up(x, m):
    return ((x + m - 1) // m) * m


def his_pattern_reference(shifts, weight_shift):
    m = jnp.mean(shifts.astype(jnp.float32), axis=-2)
    w = jax.nn.sigmoid(weight_shift.astype(jnp.float32))
    return jnp.sum(m * w, axis=-1, keepdims=True)


def _make_kernel(k, F):
    def kernel(x_ref, w_ref, o_ref):
        # x_ref: (tile_rows, Fp=k*F) lane-dense packed rows (k batches per row)
        # w_ref: (1, Fp) pre-folded sigmoid(w)/L, tiled; constant block index
        #        so the pipeline keeps it resident (no re-DMA per step).
        # o_ref: (tile_rows, k) one output per packed batch element.
        x = x_ref[...].astype(jnp.float32)
        w = w_ref[...].astype(jnp.float32)
        xw = x * w
        if k == 1:
            s = jnp.sum(xw, axis=-1, keepdims=True)            # (R, 1)
        else:
            parts = [
                jnp.sum(xw[:, c * F:(c + 1) * F], axis=-1, keepdims=True)
                for c in range(k)
            ]
            s = jnp.concatenate(parts, axis=-1)                 # (R, k)
        o_ref[...] = s.astype(o_ref.dtype)

    return kernel


def his_pattern_forward(shifts, weight_shift, *, tile_rows_override=None):
    """shifts: (..., L, D); weight_shift: (D,) -> (..., 1) in float32.

    tile_rows_override: testing hook to force a small tile (exercises the
    multi-tile / ragged-boundary path at tiny shapes).
    """
    *lead, L, D = shifts.shape
    B = math.prod(lead) if lead else 1
    F = L * D
    out_dtype = jnp.float32

    if B == 0 or F == 0:
        return his_pattern_reference(shifts, weight_shift).astype(out_dtype)

    # ---- packing factor: make rows lane-dense when F is not a lane multiple.
    if F % 128 == 0:
        k = 1
    else:
        k0 = math.lcm(F, 128) // F
        k = k0 if (k0 <= 8 and B % k0 == 0) else 1
    Fp = k * F
    rows = B // k

    # ---- wrapper-side layout plumbing (free / O(D) ops) ---------------------
    x2d = shifts.reshape(rows, Fp)                              # bitcast reshape
    w_row = (jnp.tile(jax.nn.sigmoid(weight_shift.astype(jnp.float32)), L * k)
             / jnp.float32(L)).reshape(1, Fp)

    # ---- budget-based tile sizing -------------------------------------------
    in_item = jnp.dtype(shifts.dtype).itemsize
    lane_pad = lambda n: _round_up(n, 128)
    # double-buffered input + double-buffered (lane-padded) output, per row
    per_row_bytes = 2 * lane_pad(Fp) * in_item + 2 * lane_pad(k) * 4

    try:
        vmem_cap = int(pltpu.get_tpu_info().vmem_capacity_bytes)
    except Exception:  # conservative fallback (safe on every generation)
        vmem_cap = 64 * 1024 * 1024
    budget = max(4 << 20, vmem_cap // 3)

    if tile_rows_override is not None:
        tile_rows = max(1, int(tile_rows_override))
        tile_rows = rows if tile_rows >= rows else max(8, (tile_rows // 8) * 8)
    else:
        tile_rows = max(8, (budget // per_row_bytes) // 8 * 8)
        if tile_rows >= rows:
            if rows >= 16 and rows * per_row_bytes >= (8 << 20):
                # big enough to matter: give both v7x TensorCores a tile
                tile_rows = _round_up((rows + 1) // 2, 8)
            else:
                tile_rows = rows        # single full-extent block
    num_tiles = int(pl.cdiv(rows, tile_rows))

    needed = tile_rows * per_row_bytes + 2 * 8 * lane_pad(Fp) * 4   # + weights
    vmem_limit = int(min(vmem_cap * 3 // 4, max(32 << 20, needed + (8 << 20))))

    out2d = pl.pallas_call(
        _make_kernel(k, F),
        out_shape=jax.ShapeDtypeStruct((rows, k), out_dtype),
        grid=(num_tiles,),
        in_specs=[
            pl.BlockSpec((tile_rows, Fp), lambda i: (i, 0)),    # batch-row tile
            pl.BlockSpec((1, Fp), lambda i: (0, 0)),            # resident weights
        ],
        out_specs=pl.BlockSpec((tile_rows, k), lambda i: (i, 0)),
        compiler_params=pltpu.CompilerParams(
            dimension_semantics=("parallel",),
            vmem_limit_bytes=vmem_limit,
        ),
    )(x2d, w_row)

    out = out2d.reshape(B)
    return out.reshape(*lead, 1) if lead else out.reshape(1)


if __name__ == "__main__":
    key = jax.random.PRNGKey(0)
    k1, k2, k3, k4, k5, k6 = jax.random.split(key, 6)

    # 1) Module-default shapes (dim=4), packed path (F=32 -> k=4), single tile.
    B, L, D = 4, 8, 4
    shifts = jax.random.normal(k1, (B, L, D), dtype=jnp.float32)
    weight = jax.random.normal(k2, (D,), dtype=jnp.float32)
    out = jax.block_until_ready(his_pattern_forward(shifts, weight))
    ref = his_pattern_reference(shifts, weight)
    assert out.shape == (B, 1), out.shape
    assert jnp.allclose(out, ref, atol=1e-5, rtol=1e-5)

    # 2) Packed path, multi-tile grid with a ragged (masked) last block.
    B2 = 300
    shifts2 = jax.random.normal(k3, (B2, L, D), dtype=jnp.float32)
    out2 = jax.block_until_ready(
        his_pattern_forward(shifts2, weight, tile_rows_override=16))
    ref2 = his_pattern_reference(shifts2, weight)
    assert out2.shape == (B2, 1), out2.shape
    assert jnp.allclose(out2, ref2, atol=1e-5, rtol=1e-5)

    # 3) Unpacked path (F=40 -> lcm factor too large), multi-tile + ragged tail.
    B3, D3 = 50, 5
    shifts3 = jax.random.normal(k4, (B3, L, D3), dtype=jnp.float32)
    weight3 = jax.random.normal(k5, (D3,), dtype=jnp.float32)
    out3 = jax.block_until_ready(
        his_pattern_forward(shifts3, weight3, tile_rows_override=16))
    ref3 = his_pattern_reference(shifts3, weight3)
    assert out3.shape == (B3, 1), out3.shape
    assert jnp.allclose(out3, ref3, atol=1e-5, rtol=1e-5)

    # 4) Multiple leading dims (2, 3): exercises reshape-back plumbing.
    shifts4 = jax.random.normal(k6, (2, 3, L, D), dtype=jnp.float32)
    out4 = jax.block_until_ready(his_pattern_forward(shifts4, weight))
    ref4 = his_pattern_reference(shifts4, weight)
    assert out4.shape == (2, 3, 1), out4.shape
    assert jnp.allclose(out4, ref4, atol=1e-5, rtol=1e-5)

    print("KERNEL_OK")
</pallas_src>

<mosaic_0001>
module attributes {stable_mosaic.version = 11 : i64} {
  func.func @kernel(%arg0: i32, %arg1: memref<1x128xf32, #tpu.memory_space<vmem>>, %arg2: memref<1x128xf32, #tpu.memory_space<vmem>>, %arg3: memref<1x4xf32, #tpu.memory_space<vmem>>) attributes {dimension_semantics = [#tpu.dimension_semantics<parallel>], iteration_bounds = array<i64: 1>, scalar_prefetch = 0 : i64, scratch_operands = 0 : i64, tpu.core_type = #tpu.core_type<tc>, window_params = [{transform_indices = @transform_0, window_bounds = array<i64: 1, 128>}, {pipeline_mode = #tpu.pipeline_mode<synchronous>, transform_indices = @transform_1, window_bounds = array<i64: 1, 128>}, {transform_indices = @transform_2, window_bounds = array<i64: 1, 4>}]} {
    %c0 = arith.constant 0 : index
    %c0_0 = arith.constant 0 : index
    %0 = vector.load %arg1[%c0, %c0_0] : memref<1x128xf32, #tpu.memory_space<vmem>>, vector<1x128xf32>
    %c0_1 = arith.constant 0 : index
    %c0_2 = arith.constant 0 : index
    %1 = vector.load %arg2[%c0_1, %c0_2] : memref<1x128xf32, #tpu.memory_space<vmem>>, vector<1x128xf32>
    %2 = arith.mulf %0, %1 : vector<1x128xf32>
    %3 = vector.extract_strided_slice %2 {offsets = [0, 0], sizes = [1, 32], strides = [1, 1]} : vector<1x128xf32> to vector<1x32xf32>
    %cst = arith.constant dense<0.000000e+00> : vector<1xf32>
    %4 = vector.multi_reduction <add>, %3, %cst [1] : vector<1x32xf32> to vector<1xf32>
    %5 = vector.shape_cast %4 : vector<1xf32> to vector<1x1xf32>
    %6 = vector.extract_strided_slice %2 {offsets = [0, 32], sizes = [1, 32], strides = [1, 1]} : vector<1x128xf32> to vector<1x32xf32>
    %cst_3 = arith.constant dense<0.000000e+00> : vector<1xf32>
    %7 = vector.multi_reduction <add>, %6, %cst_3 [1] : vector<1x32xf32> to vector<1xf32>
    %8 = vector.shape_cast %7 : vector<1xf32> to vector<1x1xf32>
    %9 = vector.extract_strided_slice %2 {offsets = [0, 64], sizes = [1, 32], strides = [1, 1]} : vector<1x128xf32> to vector<1x32xf32>
    %cst_4 = arith.constant dense<0.000000e+00> : vector<1xf32>
    %10 = vector.multi_reduction <add>, %9, %cst_4 [1] : vector<1x32xf32> to vector<1xf32>
    %11 = vector.shape_cast %10 : vector<1xf32> to vector<1x1xf32>
    %12 = vector.extract_strided_slice %2 {offsets = [0, 96], sizes = [1, 32], strides = [1, 1]} : vector<1x128xf32> to vector<1x32xf32>
    %cst_5 = arith.constant dense<0.000000e+00> : vector<1xf32>
    %13 = vector.multi_reduction <add>, %12, %cst_5 [1] : vector<1x32xf32> to vector<1xf32>
    %14 = vector.shape_cast %13 : vector<1xf32> to vector<1x1xf32>
    %15 = tpu.concatenate %5, %8, %11, %14 in 1 : vector<1x1xf32>, vector<1x1xf32>, vector<1x1xf32>, vector<1x1xf32> -> vector<1x4xf32>
    %c0_6 = arith.constant 0 : index
    %c0_7 = arith.constant 0 : index
    %16 = vector.load %arg3[%c0_6, %c0_7] : memref<1x4xf32, #tpu.memory_space<vmem>>, vector<1x4xf32>
    tpu.vector_store %arg3[%c0_6, %c0_7], %15 {strides = array<i32>} : memref<1x4xf32, #tpu.memory_space<vmem>>, vector<1x4xf32>,
    return
  }
  func.func @transform_0(%arg0: i32) -> (i32, i32) {
    %c0_i32 = arith.constant 0 : i32
    %c0_i32_0 = arith.constant 0 : i32
    return %arg0, %c0_i32 : i32, i32
  }
  func.func @transform_1(%arg0: i32) -> (i32, i32) {
    %c0_i32 = arith.constant 0 : i32
    %c0_i32_0 = arith.constant 0 : i32
    %c0_i32_1 = arith.constant 0 : i32
    return %c0_i32, %c0_i32_0 : i32, i32
  }
  func.func @transform_2(%arg0: i32) -> (i32, i32) {
    %c0_i32 = arith.constant 0 : i32
    %c0_i32_0 = arith.constant 0 : i32
    return %arg0, %c0_i32 : i32, i32
  }
}

</mosaic_0001>

<llo_original>
// kernel: tpu_custom_call.1
$region0: #{tpu_custom_call.1}
  #allocation0 [shape = 'u32[]', space=smem, size = 0x4, offset = 0x4, fixed_abs, tag = 'smem constant byte address 0x4 - core index']
  #allocation1 [shape = 'u32[72,128]{1,0:T(1,128)}', space=vmem, size = 0x9000, scoped, tag = 'internal scratch']
  %s0 = inlined_call_operand.hbm [shape: f32[1,128], index: 0, kind: input, shape index: {}]
  %s1 = inlined_call_operand.hbm [shape: f32[1,128], index: 1, kind: input, shape index: {}]
  %s2 = inlined_call_operand.hbm [shape: f32[1,4], index: 2, kind: output, shape index: {}]
  %s3 = sld [smem:[#allocation0]]
  $region26: #{tpu_custom_call.1} parent=0
    _
  %s5 = ssub.s32 1, %s3
  %s6 = scalar_select 0, %s5, %s3
  $region1: #{tpu_custom_call.1} parent=0
    #allocation2 [shape = 'u8[512]{0}', space=vmem, size = 0x400, scoped, tag = 'input window, operand 0, single buffered']
    #allocation3 [shape = 's32[1]{0}', space=sflag, size = 0x4, scoped, tag = 'scoped memory for tpu_custom_call.1']
    #allocation4 [shape = 's32[1]{0}', space=sflag, size = 0x4, scoped, tag = 'scoped memory for tpu_custom_call.1']
    #allocation5 [shape = 'u8[512]{0}', space=vmem, size = 0x400, scoped, tag = 'input window, operand 1, single buffered']
    #allocation6 [shape = 's32[1]{0}', space=sflag, size = 0x4, scoped, tag = 'scoped memory for tpu_custom_call.1']
    #allocation7 [shape = 'u8[512]{0}', space=vmem, size = 0x400, scoped, tag = 'output window, operand 0, single buffered']
    %7 = vsyncpa [#allocation3], 0
    %8 = vsyncpa [#allocation6], 0
    %9 = vsyncpa [#allocation4], 0
    // Predicated region
    $region2: #{tpu_custom_call.1} parent=1 // pred_check
      _
    $region3: #{tpu_custom_call.1} parent=1 // pred_check_branch
      %11 = sbr.rel (0) target = $region5
    $region4: #{tpu_custom_call.1} parent=1 // pred_region
      %13 = vsyncadd [#allocation3], 0
      %s15 = sshll.u32 %s0, 4
      %s16 = int_to_ptr.hbm [resolvable:$true] %s15
      %s17 = sshll.u32 [#allocation2], 4
      %s18 = int_to_ptr.vmem [resolvable:$true] %s17
      %20 = dma.hbm_to_vmem [thread:$0]  %s16, 16, %s18, [#allocation3]
    $region5: #{tpu_custom_call.1} parent=1 // pred_fallthru
      _
    // Predicated region
    $region6: #{tpu_custom_call.1} parent=1 // pred_check
      _
    $region7: #{tpu_custom_call.1} parent=1 // pred_check_branch
      %22 = sbr.rel (0) target = $region9
    $region8: #{tpu_custom_call.1} parent=1 // pred_region
      %24 = vsyncadd [#allocation6], 0
      %s26 = sshll.u32 %s1, 4
      %s27 = int_to_ptr.hbm [resolvable:$true] %s26
      %s28 = sshll.u32 [#allocation5], 4
      %s29 = int_to_ptr.vmem [resolvable:$true] %s28
      %31 = dma.hbm_to_vmem [thread:$0]  %s27, 16, %s29, [#allocation6]
    $region9: #{tpu_custom_call.1} parent=1 // pred_fallthru
      _
    // Predicated region
    $region10: #{tpu_custom_call.1} parent=1 // pred_check
      _
    $region11: #{tpu_custom_call.1} parent=1 // pred_check_branch
      %33 = sbr.rel (0) target = $region13
    $region12: #{tpu_custom_call.1} parent=1 // pred_region
      %35 = dma.done [#allocation3], 16
    $region13: #{tpu_custom_call.1} parent=1 // pred_fallthru
      _
    // Predicated region
    $region14: #{tpu_custom_call.1} parent=1 // pred_check
      _
    $region15: #{tpu_custom_call.1} parent=1 // pred_check_branch
      %37 = sbr.rel (0) target = $region17
    $region16: #{tpu_custom_call.1} parent=1 // pred_region
      %39 = dma.done [#allocation6], 16
    $region17: #{tpu_custom_call.1} parent=1 // pred_fallthru
      _
    %v40 = vld [vmem:[#allocation2] sm:$0x1]
    %v41 = vld [vmem:[#allocation5] sm:$0x1]
    %v42 = vmul.f32 %v40, %v41
    %vm43 = vcmask 253952
    %v44 = vsel %vm43, %v42, 0.0
    %45 = vadd.xlane.f32.xlu0 %v44
    %v46 = vpop.xlane.xlu0 %45
    %v48 = vperm.slane %v42, 0
    %49 = vrot.lane.b32.xlu0 %v48, 96
    %v50 = vpop.permute.xlu0 %49
    %v52 = vsel %vm43, %v50, 0.0
    %53 = vadd.xlane.f32.xlu0 %v52
    %v54 = vpop.xlane.xlu0 %53
    %55 = vrot.lane.b32.xlu0 %v48, 64
    %v56 = vpop.permute.xlu0 %55
    %v58 = vsel %vm43, %v56, 0.0
    %59 = vadd.xlane.f32.xlu0 %v58
    %v60 = vpop.xlane.xlu0 %59
    %61 = vrot.lane.b32.xlu0 %v48, 32
    %v62 = vpop.permute.xlu0 %61
    %v64 = vsel %vm43, %v62, 0.0
    %65 = vadd.xlane.f32.xlu0 %v64
    %v66 = vpop.xlane.xlu0 %65
    %vm67 = vcmask 7168
    %v68 = vsel %vm67, %v46, %v54
    %vm69 = vcmask 15360
    %v70 = vsel %vm69, %v68, %v60
    %vm71 = vcmask 23552
    %v72 = vsel %vm71, %v70, %v66
    %vm73 = vcmask 24576
    %74 = vst.msk [vmem:[#allocation7] sm:$0x1] %vm73, %v72
    // Predicated region
    $region18: #{tpu_custom_call.1} parent=1 // pred_check
      _
    $region19: #{tpu_custom_call.1} parent=1 // pred_check_branch
      %76 = sbr.rel (0) target = $region21
    $region20: #{tpu_custom_call.1} parent=1 // pred_region
      %78 = vsyncadd [#allocation4], 0
      %s80 = sshll.u32 [#allocation7], 4
      %s81 = int_to_ptr.vmem [resolvable:$true] %s80
      %s82 = sshll.u32 %s2, 4
      %s83 = int_to_ptr.hbm [resolvable:$true] %s82
      %85 = dma.vmem_to_hbm [thread:$0]  %s81, 16, %s83, [#allocation4]
    $region21: #{tpu_custom_call.1} parent=1 // pred_fallthru
      _
    // Predicated region
    $region22: #{tpu_custom_call.1} parent=1 // pred_check
      _
    $region23: #{tpu_custom_call.1} parent=1 // pred_check_branch
      %87 = sbr.rel (0) target = $region25
    $region24: #{tpu_custom_call.1} parent=1 // pred_region
      %89 = dma.done [#allocation4], 16
    $region25: #{tpu_custom_call.1} parent=1 // pred_fallthru
      _
    %90 = vsyncpa [#allocation3], 1
    %91 = vsyncpa [#allocation6], 1
    %92 = vsyncpa [#allocation4], 1

</llo_original>
